<compile_context>
chip_gen: v7x
topology: tpu7x:2x2x1
jax: 0.10.0
libtpu: 0.0.40
codegen_flags: <defaults>
</compile_context>

<pallas_src>
import jax
import jax.numpy as jnp
from jax.experimental import pallas as pl
from jax.experimental.pallas import tpu as pltpu

HIDDEN_UNITS = [256, 128, 64]


def _round_up(x, m):
    return ((x + m - 1) // m) * m


def dnn_kernel(x_ref, w1_ref, b1_ref, w2_ref, b2_ref, o_ref):
    # layer 1: (bm, 256) @ (256, 128) -> f32 acc, bias + ReLU in f32 on the VPU
    h = jnp.dot(x_ref[...], w1_ref[...], preferred_element_type=jnp.float32)
    h = jnp.maximum(h + b1_ref[...], 0.0)
    # feed the second MXU matmul in the compute dtype (bf16 fast path or f32)
    h = h.astype(w2_ref.dtype)
    # layer 2: (bm, 128) @ (128, 128-padded) -> f32 acc, bias + ReLU in f32
    y = jnp.dot(h, w2_ref[...], preferred_element_type=jnp.float32)
    y = jnp.maximum(y + b2_ref[...], 0.0)
    # Dropout(p=0.0) is the identity; nothing to do.
    o_ref[...] = y.astype(o_ref.dtype)


def dnn_forward(x, w1, b1, w2, b2, *, bm=512, compute_dtype=None):
    """Fused 2-layer MLP forward.

    x : (B, D_in) activations
    w1: (D_in, D_h), b1: (1, D_h)
    w2: (D_h, D_out), b2: (1, D_out)
    compute_dtype: None -> use x.dtype for the matmul inputs;
                   jnp.bfloat16 -> bf16 MXU inputs with f32 accumulation
                   (recommended on v6e / v7x).
    """
    B, D_in = x.shape
    D_h = w1.shape[1]
    D_out = w2.shape[1]
    out_dtype = x.dtype
    cdt = jnp.dtype(compute_dtype) if compute_dtype is not None else jnp.dtype(x.dtype)

    # ---- lane-dense output: pad the final feature dim to a multiple of 128 ----
    D_out_pad = max(_round_up(D_out, 128), 128)
    if D_out_pad != D_out:
        w2 = jnp.pad(w2, ((0, 0), (0, D_out_pad - D_out)))
        b2 = jnp.pad(b2, ((0, 0), (0, D_out_pad - D_out)))

    # ---- batch tiling: as large as possible, clamped to the (8-aligned) batch ----
    bm_eff = min(bm, max(_round_up(B, 8), 8))
    B_pad = _round_up(B, bm_eff)
    # Keep >= 2 grid steps when the tile is big enough that halving it does not
    # hurt MXU utilization -> both v7x TensorCores get work on the parallel axis.
    if (B_pad // bm_eff) < 2 and bm_eff >= 512 and bm_eff % 16 == 0:
        bm_eff //= 2
    if B_pad != B:
        x = jnp.pad(x, ((0, B_pad - B), (0, 0)))
    grid = (B_pad // bm_eff,)

    # ---- dtype plumbing (weights/acts in compute dtype, biases stay f32) ----
    x_c = x.astype(cdt)
    w1_c = w1.astype(cdt)
    w2_c = w2.astype(cdt)
    b1_f = b1.astype(jnp.float32)
    b2_f = b2.astype(jnp.float32)

    # ---- cost estimate (helps XLA schedule around the custom call) ----
    flops = 2 * B_pad * (D_in * D_h + D_h * D_out_pad)
    bytes_accessed = (
        x_c.size * x_c.dtype.itemsize
        + w1_c.size * w1_c.dtype.itemsize
        + w2_c.size * w2_c.dtype.itemsize
        + b1_f.size * 4
        + b2_f.size * 4
        + B_pad * D_out_pad * jnp.dtype(out_dtype).itemsize
    )
    cost = pl.CostEstimate(flops=flops, transcendentals=0,
                           bytes_accessed=bytes_accessed)

    # ---- explicit VMEM budget: double-buffered x/out tiles + weights + headroom ----
    c_item = jnp.dtype(cdt).itemsize
    o_item = jnp.dtype(out_dtype).itemsize
    vmem_limit = int(min(
        2 * bm_eff * D_in * c_item                       # x tile, double-buffered
        + 2 * bm_eff * D_out_pad * o_item                # out tile, double-buffered
        + 2 * (D_in * D_h + D_h * D_out_pad) * c_item    # weights
        + 2 * (D_h + D_out_pad) * 4                      # biases
        + (8 << 20),                                     # headroom (f32 temps, scratch)
        48 << 20,                                        # stays safe on v7x's 64 MiB VMEM
    ))

    out_padded = pl.pallas_call(
        dnn_kernel,
        out_shape=jax.ShapeDtypeStruct((B_pad, D_out_pad), out_dtype),
        grid_spec=pltpu.PrefetchScalarGridSpec(
            num_scalar_prefetch=0,
            grid=grid,
            in_specs=[
                pl.BlockSpec((bm_eff, D_in), lambda i: (i, 0)),      # x tile
                pl.BlockSpec((D_in, D_h), lambda i: (0, 0)),         # W1 (resident)
                pl.BlockSpec((1, D_h), lambda i: (0, 0)),            # b1
                pl.BlockSpec((D_h, D_out_pad), lambda i: (0, 0)),    # W2 (padded, resident)
                pl.BlockSpec((1, D_out_pad), lambda i: (0, 0)),      # b2 (padded)
            ],
            out_specs=pl.BlockSpec((bm_eff, D_out_pad), lambda i: (i, 0)),
        ),
        compiler_params=pltpu.CompilerParams(
            dimension_semantics=("parallel",),
            vmem_limit_bytes=vmem_limit,
        ),
        cost_estimate=cost,
    )(x_c, w1_c, b1_f, w2_c, b2_f)

    # strip batch + lane padding to restore the (B, D_out) contract
    return out_padded[:B, :D_out]


def init_params(key, hidden_units):
    """Deterministic init mimicking nn.Linear defaults: U(-1/sqrt(fan_in), 1/sqrt(fan_in))."""
    params = []
    for d_in, d_out in zip(hidden_units[:-1], hidden_units[1:]):
        key, kw, kb = jax.random.split(key, 3)
        bound = 1.0 / jnp.sqrt(jnp.float32(d_in))
        # stored as (in, out) == PyTorch weight.T
        w = jax.random.uniform(kw, (d_in, d_out), jnp.float32, -bound, bound)
        b = jax.random.uniform(kb, (1, d_out), jnp.float32, -bound, bound)
        params.append((w, b))
    return params


def _ref_forward(x, w1, b1, w2, b2):
    h = jnp.maximum(x @ w1 + b1, 0.0)
    return jnp.maximum(h @ w2 + b2, 0.0)


if __name__ == "__main__":
    key = jax.random.PRNGKey(0)
    k_x, k_x2, k_p = jax.random.split(key, 3)

    (w1, b1), (w2, b2) = init_params(k_p, HIDDEN_UNITS)

    # ---- small f32 run (strict numerical check) ----
    B = 32
    x = jax.random.normal(k_x, (B, HIDDEN_UNITS[0]), jnp.float32)
    out = jax.block_until_ready(dnn_forward(x, w1, b1, w2, b2))
    ref = _ref_forward(x, w1, b1, w2, b2)
    assert out.shape == (B, HIDDEN_UNITS[-1])
    assert jnp.allclose(out, ref, atol=1e-5, rtol=1e-5)

    # ---- multi-step grid + bf16 MXU-input fast path (v6e/v7x), loose tolerance ----
    B2 = 512
    x2 = jax.random.normal(k_x2, (B2, HIDDEN_UNITS[0]), jnp.float32)
    out2 = jax.block_until_ready(
        dnn_forward(x2, w1, b1, w2, b2, bm=256, compute_dtype=jnp.bfloat16)
    )
    ref2 = _ref_forward(x2, w1, b1, w2, b2)
    assert out2.shape == (B2, HIDDEN_UNITS[-1])
    assert jnp.allclose(out2, ref2, atol=5e-2, rtol=5e-2)

    print("KERNEL_OK")
</pallas_src>

<mosaic_0001>
module attributes {stable_mosaic.version = 11 : i64} {
  func.func @dnn_kernel(%arg0: i32, %arg1: memref<32x256xf32, #tpu.memory_space<vmem>>, %arg2: memref<256x128xf32, #tpu.memory_space<vmem>>, %arg3: memref<1x128xf32, #tpu.memory_space<vmem>>, %arg4: memref<128x128xf32, #tpu.memory_space<vmem>>, %arg5: memref<1x128xf32, #tpu.memory_space<vmem>>, %arg6: memref<32x128xf32, #tpu.memory_space<vmem>>) attributes {dimension_semantics = [#tpu.dimension_semantics<parallel>], iteration_bounds = array<i64: 1>, scalar_prefetch = 0 : i64, scratch_operands = 0 : i64, tpu.core_type = #tpu.core_type<tc>, window_params = [{transform_indices = @transform_0, window_bounds = array<i64: 32, 256>}, {pipeline_mode = #tpu.pipeline_mode<synchronous>, transform_indices = @transform_1, window_bounds = array<i64: 256, 128>}, {pipeline_mode = #tpu.pipeline_mode<synchronous>, transform_indices = @transform_2, window_bounds = array<i64: 1, 128>}, {pipeline_mode = #tpu.pipeline_mode<synchronous>, transform_indices = @transform_3, window_bounds = array<i64: 128, 128>}, {pipeline_mode = #tpu.pipeline_mode<synchronous>, transform_indices = @transform_4, window_bounds = array<i64: 1, 128>}, {transform_indices = @transform_5, window_bounds = array<i64: 32, 128>}]} {
    %c0 = arith.constant 0 : index
    %c0_0 = arith.constant 0 : index
    %0 = vector.load %arg1[%c0, %c0_0] : memref<32x256xf32, #tpu.memory_space<vmem>>, vector<32x256xf32>
    %c0_1 = arith.constant 0 : index
    %c0_2 = arith.constant 0 : index
    %1 = vector.load %arg2[%c0_1, %c0_2] : memref<256x128xf32, #tpu.memory_space<vmem>>, vector<256x128xf32>
    %cst = arith.constant dense<0.000000e+00> : vector<32x128xf32>
    %2 = tpu.matmul %0, %1, %cst {dimension_numbers = #tpu.dot_dimension_numbers<[1], [0], [0], [1], [0, 0, 1, 1], [], []>} : vector<32x256xf32>, vector<256x128xf32>, vector<32x128xf32> -> vector<32x128xf32>
    %c0_3 = arith.constant 0 : index
    %c0_4 = arith.constant 0 : index
    %3 = vector.load %arg3[%c0_3, %c0_4] : memref<1x128xf32, #tpu.memory_space<vmem>>, vector<1x128xf32>
    %4 = vector.broadcast %3 : vector<1x128xf32> to vector<32x128xf32>
    %5 = arith.addf %2, %4 : vector<32x128xf32>
    %cst_5 = arith.constant 0.000000e+00 : f32
    %6 = vector.broadcast %cst_5 : f32 to vector<32x128xf32>
    %7 = arith.maximumf %5, %6 : vector<32x128xf32>
    %c0_6 = arith.constant 0 : index
    %c0_7 = arith.constant 0 : index
    %8 = vector.load %arg4[%c0_6, %c0_7] : memref<128x128xf32, #tpu.memory_space<vmem>>, vector<128x128xf32>
    %cst_8 = arith.constant dense<0.000000e+00> : vector<32x128xf32>
    %9 = tpu.matmul %7, %8, %cst_8 {dimension_numbers = #tpu.dot_dimension_numbers<[1], [0], [0], [1], [0, 0, 1, 1], [], []>} : vector<32x128xf32>, vector<128x128xf32>, vector<32x128xf32> -> vector<32x128xf32>
    %c0_9 = arith.constant 0 : index
    %c0_10 = arith.constant 0 : index
    %10 = vector.load %arg5[%c0_9, %c0_10] : memref<1x128xf32, #tpu.memory_space<vmem>>, vector<1x128xf32>
    %11 = vector.broadcast %10 : vector<1x128xf32> to vector<32x128xf32>
    %12 = arith.addf %9, %11 : vector<32x128xf32>
    %cst_11 = arith.constant 0.000000e+00 : f32
    %13 = vector.broadcast %cst_11 : f32 to vector<32x128xf32>
    %14 = arith.maximumf %12, %13 : vector<32x128xf32>
    %c0_12 = arith.constant 0 : index
    %c0_13 = arith.constant 0 : index
    %15 = vector.load %arg6[%c0_12, %c0_13] : memref<32x128xf32, #tpu.memory_space<vmem>>, vector<32x128xf32>
    tpu.vector_store %arg6[%c0_12, %c0_13], %14 {strides = array<i32>} : memref<32x128xf32, #tpu.memory_space<vmem>>, vector<32x128xf32>,
    return
  }
  func.func @transform_0(%arg0: i32) -> (i32, i32) {
    %c0_i32 = arith.constant 0 : i32
    %c0_i32_0 = arith.constant 0 : i32
    return %arg0, %c0_i32 : i32, i32
  }
  func.func @transform_1(%arg0: i32) -> (i32, i32) {
    %c0_i32 = arith.constant 0 : i32
    %c0_i32_0 = arith.constant 0 : i32
    %c0_i32_1 = arith.constant 0 : i32
    return %c0_i32, %c0_i32_0 : i32, i32
  }
  func.func @transform_2(%arg0: i32) -> (i32, i32) {
    %c0_i32 = arith.constant 0 : i32
    %c0_i32_0 = arith.constant 0 : i32
    %c0_i32_1 = arith.constant 0 : i32
    return %c0_i32, %c0_i32_0 : i32, i32
  }
  func.func @transform_3(%arg0: i32) -> (i32, i32) {
    %c0_i32 = arith.constant 0 : i32
    %c0_i32_0 = arith.constant 0 : i32
    %c0_i32_1 = arith.constant 0 : i32
    return %c0_i32, %c0_i32_0 : i32, i32
  }
  func.func @transform_4(%arg0: i32) -> (i32, i32) {
    %c0_i32 = arith.constant 0 : i32
    %c0_i32_0 = arith.constant 0 : i32
    %c0_i32_1 = arith.constant 0 : i32
    return %c0_i32, %c0_i32_0 : i32, i32
  }
  func.func @transform_5(%arg0: i32) -> (i32, i32) {
    %c0_i32 = arith.constant 0 : i32
    %c0_i32_0 = arith.constant 0 : i32
    return %arg0, %c0_i32 : i32, i32
  }
}

</mosaic_0001>

<llo_original>
// kernel: tpu_custom_call.1
$region0: #{tpu_custom_call.1}
  #allocation0 [shape = 'u32[]', space=smem, size = 0x4, offset = 0x4, fixed_abs, tag = 'smem constant byte address 0x4 - core index']
  #allocation1 [shape = 'u32[144,128]{1,0:T(1,128)}', space=vmem, size = 0x12000, scoped, tag = 'internal scratch']
  %s0 = inlined_call_operand.hbm [shape: f32[32,256], index: 0, kind: input, shape index: {}]
  %s1 = inlined_call_operand.hbm [shape: f32[256,128], index: 1, kind: input, shape index: {}]
  %s2 = inlined_call_operand.vmem [shape: f32[1,128], index: 2, kind: input, shape index: {}]
  %s3 = inlined_call_operand.hbm [shape: f32[128,128], index: 3, kind: input, shape index: {}]
  %s4 = inlined_call_operand.vmem [shape: f32[1,128], index: 4, kind: input, shape index: {}]
  %s5 = inlined_call_operand.hbm [shape: f32[32,128], index: 5, kind: output, shape index: {}]
  %s6 = sld [smem:[#allocation0]]
  $region42: #{tpu_custom_call.1} parent=0
    _
  %s8 = ssub.s32 1, %s6
  %s9 = scalar_select 0, %s8, %s6
  $region1: #{tpu_custom_call.1} parent=0
    #allocation2 [shape = 'u8[32768]{0}', space=vmem, size = 0x8000, scoped, tag = 'input window, operand 0, single buffered']
    #allocation3 [shape = 's32[1]{0}', space=sflag, size = 0x4, scoped, tag = 'scoped memory for tpu_custom_call.1']
    #allocation4 [shape = 's32[1]{0}', space=sflag, size = 0x4, scoped, tag = 'scoped memory for tpu_custom_call.1']
    #allocation5 [shape = 'u8[131072]{0}', space=vmem, size = 0x20000, scoped, tag = 'input window, operand 1, single buffered']
    #allocation6 [shape = 's32[1]{0}', space=sflag, size = 0x4, scoped, tag = 'scoped memory for tpu_custom_call.1']
    #allocation7 [shape = 'u8[65536]{0}', space=vmem, size = 0x10000, scoped, tag = 'input window, operand 3, single buffered']
    #allocation8 [shape = 'u8[16384]{0}', space=vmem, size = 0x4000, scoped, tag = 'output window, operand 0, single buffered']
    %10 = vsyncpa [#allocation3], 0
    %11 = vsyncpa [#allocation6], 0
    %12 = vsyncpa [#allocation4], 0
    // Predicated region
    $region2: #{tpu_custom_call.1} parent=1 // pred_check
      _
    $region3: #{tpu_custom_call.1} parent=1 // pred_check_branch
      %14 = sbr.rel (0) target = $region5
    $region4: #{tpu_custom_call.1} parent=1 // pred_region
      %s16 = ssub.s32 1024, 1024
      %17 = vsyncadd [#allocation3], %s16
      %s18 = sshll.u32 [#allocation2], 4
      %s19 = int_to_ptr.vmem [resolvable:$true] %s18
      %24 = dma.hbm_to_vmem [thread:$0]  %s0, 1024, %s19, [#allocation3], 256, 256, 16
    $region5: #{tpu_custom_call.1} parent=1 // pred_fallthru
      _
    // Predicated region
    $region6: #{tpu_custom_call.1} parent=1 // pred_check
      _
    $region7: #{tpu_custom_call.1} parent=1 // pred_check_branch
      %26 = sbr.rel (0) target = $region9
    $region8: #{tpu_custom_call.1} parent=1 // pred_region
      %s28 = ssub.s32 4096, 4096
      %29 = vsyncadd [#allocation6], %s28
      %s30 = sshll.u32 [#allocation5], 4
      %s31 = int_to_ptr.vmem [resolvable:$true] %s30
      %36 = dma.hbm_to_vmem [thread:$0]  %s1, 4096, %s31, [#allocation6], 128, 128, 8
    $region9: #{tpu_custom_call.1} parent=1 // pred_fallthru
      _
    // Predicated region
    $region10: #{tpu_custom_call.1} parent=1 // pred_check
      _
    $region11: #{tpu_custom_call.1} parent=1 // pred_check_branch
      %38 = sbr.rel (0) target = $region13
    $region12: #{tpu_custom_call.1} parent=1 // pred_region
      _
    $region13: #{tpu_custom_call.1} parent=1 // pred_fallthru
      _
    // Predicated region
    $region14: #{tpu_custom_call.1} parent=1 // pred_check
      _
    $region15: #{tpu_custom_call.1} parent=1 // pred_check_branch
      %40 = sbr.rel (0) target = $region17
    $region16: #{tpu_custom_call.1} parent=1 // pred_region
      %s42 = ssub.s32 2048, 2048
      %43 = vsyncadd [#allocation6], %s42
      %s44 = sshll.u32 [#allocation7], 4
      %s45 = int_to_ptr.vmem [resolvable:$true] %s44
      %50 = dma.hbm_to_vmem [thread:$0]  %s3, 2048, %s45, [#allocation6], 128, 128, 8
    $region17: #{tpu_custom_call.1} parent=1 // pred_fallthru
      _
    // Predicated region
    $region18: #{tpu_custom_call.1} parent=1 // pred_check
      _
    $region19: #{tpu_custom_call.1} parent=1 // pred_check_branch
      %52 = sbr.rel (0) target = $region21
    $region20: #{tpu_custom_call.1} parent=1 // pred_region
      _
    $region21: #{tpu_custom_call.1} parent=1 // pred_fallthru
      _
    // Predicated region
    $region22: #{tpu_custom_call.1} parent=1 // pred_check
      _
    $region23: #{tpu_custom_call.1} parent=1 // pred_check_branch
      %54 = sbr.rel (0) target = $region25
    $region24: #{tpu_custom_call.1} parent=1 // pred_region
      %55 = dma.done [#allocation3], 1024
    $region25: #{tpu_custom_call.1} parent=1 // pred_fallthru
      _
    // Predicated region
    $region26: #{tpu_custom_call.1} parent=1 // pred_check
      _
    $region27: #{tpu_custom_call.1} parent=1 // pred_check_branch
      %57 = sbr.rel (0) target = $region29
    $region28: #{tpu_custom_call.1} parent=1 // pred_region
      %58 = dma.done [#allocation6], 4096
    $region29: #{tpu_custom_call.1} parent=1 // pred_fallthru
      _
    // Predicated region
    $region30: #{tpu_custom_call.1} parent=1 // pred_check
      _
    $region31: #{tpu_custom_call.1} parent=1 // pred_check_branch
      %60 = sbr.rel (0) target = $region33
    $region32: #{tpu_custom_call.1} parent=1 // pred_region
      %61 = dma.done [#allocation6], 2048
    $region33: #{tpu_custom_call.1} parent=1 // pred_fallthru
      _
    %v62 = vld [vmem:[#allocation2] sm:$0xff]
    %v63 = vld [vmem:[#allocation2 + $0x8] sm:$0xff]
    %v64 = vld [vmem:[#allocation2 + $0x10] sm:$0xff]
    %v65 = vld [vmem:[#allocation2 + $0x18] sm:$0xff]
    %v66 = vld [vmem:[#allocation2 + $0x20] sm:$0xff]
    %v67 = vld [vmem:[#allocation2 + $0x28] sm:$0xff]
    %v68 = vld [vmem:[#allocation2 + $0x30] sm:$0xff]
    %v69 = vld [vmem:[#allocation2 + $0x38] sm:$0xff]
    %v70 = vld [vmem:[#allocation5] sm:$0xff]
    %v71 = vld [vmem:[#allocation5 + $0x8] sm:$0xff]
    %v72 = vld [vmem:[#allocation5 + $0x10] sm:$0xff]
    %v73 = vld [vmem:[#allocation5 + $0x18] sm:$0xff]
    %v74 = vld [vmem:[#allocation5 + $0x20] sm:$0xff]
    %v75 = vld [vmem:[#allocation5 + $0x28] sm:$0xff]
    %v76 = vld [vmem:[#allocation5 + $0x30] sm:$0xff]
    %v77 = vld [vmem:[#allocation5 + $0x38] sm:$0xff]
    %v78 = vld [vmem:[#allocation5 + $0x40] sm:$0xff]
    %v79 = vld [vmem:[#allocation5 + $0x48] sm:$0xff]
    %v80 = vld [vmem:[#allocation5 + $0x50] sm:$0xff]
    %v81 = vld [vmem:[#allocation5 + $0x58] sm:$0xff]
    %v82 = vld [vmem:[#allocation5 + $0x60] sm:$0xff]
    %v83 = vld [vmem:[#allocation5 + $0x68] sm:$0xff]
    %v84 = vld [vmem:[#allocation5 + $0x70] sm:$0xff]
    %v85 = vld [vmem:[#allocation5 + $0x78] sm:$0xff]
    %v86 = vld [vmem:[#allocation5 + $0x80] sm:$0xff]
    %v87 = vld [vmem:[#allocation5 + $0x88] sm:$0xff]
    %v88 = vld [vmem:[#allocation5 + $0x90] sm:$0xff]
    %v89 = vld [vmem:[#allocation5 + $0x98] sm:$0xff]
    %v90 = vld [vmem:[#allocation5 + $0xa0] sm:$0xff]
    %v91 = vld [vmem:[#allocation5 + $0xa8] sm:$0xff]
    %v92 = vld [vmem:[#allocation5 + $0xb0] sm:$0xff]
    %v93 = vld [vmem:[#allocation5 + $0xb8] sm:$0xff]
    %v94 = vld [vmem:[#allocation5 + $0xc0] sm:$0xff]
    %v95 = vld [vmem:[#allocation5 + $0xc8] sm:$0xff]
    %v96 = vld [vmem:[#allocation5 + $0xd0] sm:$0xff]
    %v97 = vld [vmem:[#allocation5 + $0xd8] sm:$0xff]
    %v98 = vld [vmem:[#allocation5 + $0xe0] sm:$0xff]
    %v99 = vld [vmem:[#allocation5 + $0xe8] sm:$0xff]
    %v100 = vld [vmem:[#allocation5 + $0xf0] sm:$0xff]
    %v101 = vld [vmem:[#allocation5 + $0xf8] sm:$0xff]
    %v102 = vld [vmem:[%s2] sm:$0x1]
    %v104 = vlaneseq
    %v105 = vshrl.u32 %v104, 7
    %v106 = vsub.s32 0, %v105
    %v107 = vrot.slane %v102, %v106
    %109 = vmatprep.subr.mxu0 0.0
    %110 = vmatpush1.msra.mxu0 %v70
    %111 = vmatprep.subr.mxu0 0.0
    %112 = vmatpush1.msra.mxu0 %v71
    %113 = vmatprep.subr.mxu0 0.0
    %114 = vmatpush1.msra.mxu0 %v72
    %115 = vmatprep.subr.mxu0 0.0
    %116 = vmatpush1.msra.mxu0 %v73
    %117 = vmatprep.subr.mxu0 0.0
    %118 = vmatpush1.msra.mxu0 %v74
    %119 = vmatprep.subr.mxu0 0.0
    %120 = vmatpush1.msra.mxu0 %v75
    %121 = vmatprep.subr.mxu0 0.0
    %122 = vmatpush1.msra.mxu0 %v76
    %123 = vmatprep.subr.mxu0 0.0
    %124 = vmatpush1.msra.mxu0 %v77
    %125 = vmatprep.subr.mxu0 0.0
    %126 = vmatpush1.msra.mxu0 %v78
    %127 = vmatprep.subr.mxu0 0.0
    %128 = vmatpush1.msra.mxu0 %v79
    %129 = vmatprep.subr.mxu0 0.0
    %130 = vmatpush1.msra.mxu0 %v80
    %131 = vmatprep.subr.mxu0 0.0
    %132 = vmatpush1.msra.mxu0 %v81
    %133 = vmatprep.subr.mxu0 0.0
    %134 = vmatpush1.msra.mxu0 %v82
    %135 = vmatprep.subr.mxu0 0.0
    %136 = vmatpush1.msra.mxu0 %v83
    %137 = vmatprep.subr.mxu0 0.0
    %138 = vmatpush1.msra.mxu0 %v84
    %139 = vmatprep.subr.mxu0 0.0
    %140 = vmatpush1.msra.mxu0 %v85
    %141 = vmatprep.subr.mxu0 0.0
    %142 = vmatpush1.msra.mxu0 %v86
    %143 = vmatprep.subr.mxu0 0.0
    %144 = vmatpush1.msra.mxu0 %v87
    %145 = vmatprep.subr.mxu0 0.0
    %146 = vmatpush1.msra.mxu0 %v88
    %147 = vmatprep.subr.mxu0 0.0
    %148 = vmatpush1.msra.mxu0 %v89
    %149 = vmatprep.subr.mxu0 0.0
    %150 = vmatpush1.msra.mxu0 %v90
    %151 = vmatprep.subr.mxu0 0.0
    %152 = vmatpush1.msra.mxu0 %v91
    %153 = vmatprep.subr.mxu0 0.0
    %154 = vmatpush1.msra.mxu0 %v92
    %155 = vmatprep.subr.mxu0 0.0
    %156 = vmatpush1.msra.mxu0 %v93
    %157 = vmatprep.subr.mxu0 0.0
    %158 = vmatpush1.msra.mxu0 %v94
    %159 = vmatprep.subr.mxu0 0.0
    %160 = vmatpush1.msra.mxu0 %v95
    %161 = vmatprep.subr.mxu0 0.0
    %162 = vmatpush1.msra.mxu0 %v96
    %163 = vmatprep.subr.mxu0 0.0
    %164 = vmatpush1.msra.mxu0 %v97
    %165 = vmatprep.subr.mxu0 0.0
    %166 = vmatpush1.msra.mxu0 %v98
    %167 = vmatprep.subr.mxu0 0.0
    %168 = vmatpush1.msra.mxu0 %v99
    %169 = vmatprep.subr.mxu0 0.0
    %170 = vmatpush1.msra.mxu0 %v100
    %171 = vmatprep.subr.mxu0 0.0
    %172 = vmatpush1.msra.mxu0 %v101
    %173 = vmatprep.mubr.f32.mxu0 %v63
    %174 = vmatmul.mubr.f32.gmra.mrb[0].mxu0 %v62
    %v175 = vpop.f32.mrb[0].mxu0
    %v176 = vadd.f32 %v107, %v175
    %v177 = vpop.f32.mrb[0].mxu0
    %178 = vmatprep.mubr.f32.mxu0 %v65
    %179 = vmatmul.mubr.f32.gmra.mrb[0].mxu0 %v64
    %v180 = vpop.f32.mrb[0].mxu0
    %v181 = vadd.f32 %v107, %v180
    %v182 = vpop.f32.mrb[0].mxu0
    %183 = vmatprep.mubr.f32.mxu0 %v67
    %184 = vmatmul.mubr.f32.gmra.mrb[0].mxu0 %v66
    %v185 = vpop.f32.mrb[0].mxu0
    %v186 = vadd.f32 %v107, %v185
    %v187 = vpop.f32.mrb[0].mxu0
    %188 = vmatprep.mubr.f32.mxu0 %v69
    %189 = vmatmul.mubr.f32.gmra.mrb[0].mxu0 %v68
    %v190 = vpop.f32.mrb[0].mxu0
    %v191 = vadd.f32 %v107, %v190
    %v192 = vpop.f32.mrb[0].mxu0
    %193 = vdwg.mxu0
    %v194 = vmax.f32 %v176, 0.0
    %v195 = vmax.f32 %v181, 0.0
    %v196 = vmax.f32 %v186, 0.0
    %v197 = vmax.f32 %v191, 0.0
    %v198 = vld [vmem:[#allocation7] sm:$0xff]
    %v199 = vld [vmem:[#allocation7 + $0x8] sm:$0xff]
    %v200 = vld [vmem:[#allocation7 + $0x10] sm:$0xff]
    %v201 = vld [vmem:[#allocation7 + $0x18] sm:$0xff]
    %v202 = vld [vmem:[#allocation7 + $0x20] sm:$0xff]
    %v203 = vld [vmem:[#allocation7 + $0x28] sm:$0xff]
    %v204 = vld [vmem:[#allocation7 + $0x30] sm:$0xff]
    %v205 = vld [vmem:[#allocation7 + $0x38] sm:$0xff]
    %v206 = vld [vmem:[#allocation7 + $0x40] sm:$0xff]
    %v207 = vld [vmem:[#allocation7 + $0x48] sm:$0xff]
    %v208 = vld [vmem:[#allocation7 + $0x50] sm:$0xff]
    %v209 = vld [vmem:[#allocation7 + $0x58] sm:$0xff]
    %v210 = vld [vmem:[#allocation7 + $0x60] sm:$0xff]
    %v211 = vld [vmem:[#allocation7 + $0x68] sm:$0xff]
    %v212 = vld [vmem:[#allocation7 + $0x70] sm:$0xff]
    %v213 = vld [vmem:[#allocation7 + $0x78] sm:$0xff]
    %v214 = vld [vmem:[%s4] sm:$0x1]
    %v216 = vlaneseq
    %v217 = vshrl.u32 %v216, 7
    %v218 = vsub.s32 0, %v217
    %v219 = vrot.slane %v214, %v218
    %221 = vmatprep.subr.mxu0 0.0
    %222 = vmatpush1.msra.mxu0 %v198
    %223 = vmatprep.subr.mxu0 0.0
    %224 = vmatpush1.msra.mxu0 %v199
    %225 = vmatprep.subr.mxu0 0.0
    %226 = vmatpush1.msra.mxu0 %v200
    %227 = vmatprep.subr.mxu0 0.0
    %228 = vmatpush1.msra.mxu0 %v201
    %229 = vmatprep.subr.mxu0 0.0
    %230 = vmatpush1.msra.mxu0 %v202
    %231 = vmatprep.subr.mxu0 0.0
    %232 = vmatpush1.msra.mxu0 %v203
    %233 = vmatprep.subr.mxu0 0.0
    %234 = vmatpush1.msra.mxu0 %v204
    %235 = vmatprep.subr.mxu0 0.0
    %236 = vmatpush1.msra.mxu0 %v205
    %237 = vmatprep.subr.mxu0 0.0
    %238 = vmatpush1.msra.mxu0 %v206
    %239 = vmatprep.subr.mxu0 0.0
    %240 = vmatpush1.msra.mxu0 %v207
    %241 = vmatprep.subr.mxu0 0.0
    %242 = vmatpush1.msra.mxu0 %v208
    %243 = vmatprep.subr.mxu0 0.0
    %244 = vmatpush1.msra.mxu0 %v209
    %245 = vmatprep.subr.mxu0 0.0
    %246 = vmatpush1.msra.mxu0 %v210
    %247 = vmatprep.subr.mxu0 0.0
    %248 = vmatpush1.msra.mxu0 %v211
    %249 = vmatprep.subr.mxu0 0.0
    %250 = vmatpush1.msra.mxu0 %v212
    %251 = vmatprep.subr.mxu0 0.0
    %252 = vmatpush1.msra.mxu0 %v213
    %253 = vmatprep.subr.mxu0 0.0
    %254 = vmatpush1.msra.mxu0 0.0
    %255 = vmatprep.subr.mxu0 0.0
    %256 = vmatpush1.msra.mxu0 0.0
    %257 = vmatprep.subr.mxu0 0.0
    %258 = vmatpush1.msra.mxu0 0.0
    %259 = vmatprep.subr.mxu0 0.0
    %260 = vmatpush1.msra.mxu0 0.0
    %261 = vmatprep.subr.mxu0 0.0
    %262 = vmatpush1.msra.mxu0 0.0
    %263 = vmatprep.subr.mxu0 0.0
    %264 = vmatpush1.msra.mxu0 0.0
    %265 = vmatprep.subr.mxu0 0.0
    %266 = vmatpush1.msra.mxu0 0.0
    %267 = vmatprep.subr.mxu0 0.0
    %268 = vmatpush1.msra.mxu0 0.0
    %269 = vmatprep.subr.mxu0 0.0
    %270 = vmatpush1.msra.mxu0 0.0
    %271 = vmatprep.subr.mxu0 0.0
    %272 = vmatpush1.msra.mxu0 0.0
    %273 = vmatprep.subr.mxu0 0.0
    %274 = vmatpush1.msra.mxu0 0.0
    %275 = vmatprep.subr.mxu0 0.0
    %276 = vmatpush1.msra.mxu0 0.0
    %277 = vmatprep.subr.mxu0 0.0
    %278 = vmatpush1.msra.mxu0 0.0
    %279 = vmatprep.subr.mxu0 0.0
    %280 = vmatpush1.msra.mxu0 0.0
    %281 = vmatprep.subr.mxu0 0.0
    %282 = vmatpush1.msra.mxu0 0.0
    %283 = vmatprep.subr.mxu0 0.0
    %284 = vmatpush1.msra.mxu0 0.0
    %285 = vmatprep.mubr.f32.mxu0 0.0
    %286 = vmatmul.mubr.f32.gmra.mrb[0].mxu0 %v194
    %v287 = vpop.f32.mrb[0].mxu0
    %v288 = vadd.f32 %v219, %v287
    %v289 = vpop.f32.mrb[0].mxu0
    %290 = vmatprep.mubr.f32.mxu0 0.0
    %291 = vmatmul.mubr.f32.gmra.mrb[0].mxu0 %v195
    %v292 = vpop.f32.mrb[0].mxu0
    %v293 = vadd.f32 %v219, %v292
    %v294 = vpop.f32.mrb[0].mxu0
    %295 = vmatprep.mubr.f32.mxu0 0.0
    %296 = vmatmul.mubr.f32.gmra.mrb[0].mxu0 %v196
    %v297 = vpop.f32.mrb[0].mxu0
    %v298 = vadd.f32 %v219, %v297
    %v299 = vpop.f32.mrb[0].mxu0
    %300 = vmatprep.mubr.f32.mxu0 0.0
    %301 = vmatmul.mubr.f32.gmra.mrb[0].mxu0 %v197
    %v302 = vpop.f32.mrb[0].mxu0
    %v303 = vadd.f32 %v219, %v302
    %v304 = vpop.f32.mrb[0].mxu0
    %305 = vdwg.mxu0
    %v306 = vmax.f32 %v288, 0.0
    %v307 = vmax.f32 %v293, 0.0
    %v308 = vmax.f32 %v298, 0.0
    %v309 = vmax.f32 %v303, 0.0
    %310 = vst [vmem:[#allocation8] sm:$0xff] %v306
    %311 = vst [vmem:[#allocation8 + $0x8] sm:$0xff] %v307
    %312 = vst [vmem:[#allocation8 + $0x10] sm:$0xff] %v308
    %313 = vst [vmem:[#allocation8 + $0x18] sm:$0xff] %v309
    // Predicated region
    $region34: #{tpu_custom_call.1} parent=1 // pred_check
      _
    $region35: #{tpu_custom_call.1} parent=1 // pred_check_branch
      %315 = sbr.rel (0) target = $region37
    $region36: #{tpu_custom_call.1} parent=1 // pred_region
      %s317 = ssub.s32 512, 512
      %318 = vsyncadd [#allocation4], %s317
      %s319 = sshll.u32 [#allocation8], 4
      %s320 = int_to_ptr.vmem [resolvable:$true] %s319
      %325 = dma.vmem_to_hbm [thread:$0]  %s320, 512, %s5, [#allocation4], 128, 128, 8
    $region37: #{tpu_custom_call.1} parent=1 // pred_fallthru
      _
    // Predicated region
    $region38: #{tpu_custom_call.1} parent=1 // pred_check
      _
    $region39: #{tpu_custom_call.1} parent=1 // pred_check_branch
      %327 = sbr.rel (0) target = $region41
    $region40: #{tpu_custom_call.1} parent=1 // pred_region
      %328 = dma.done [#allocation4], 512
    $region41: #{tpu_custom_call.1} parent=1 // pred_fallthru
      _
    %329 = vsyncpa [#allocation3], 1
    %330 = vsyncpa [#allocation6], 1
    %331 = vsyncpa [#allocation4], 1

</llo_original>
